<compile_context>
chip_gen: v6e
topology: v6e:2x2x1
jax: 0.10.0
libtpu: 0.0.40
codegen_flags: <defaults>
</compile_context>

<pallas_src>
import functools
import math

import jax
import jax.numpy as jnp
from jax.experimental import pallas as pl
from jax.experimental.pallas import tpu as pltpu


def _round_up(x, m):
    return (x + m - 1) // m * m


def _vmem_cap_bytes():
    """Per-core VMEM capacity; conservative v7x fallback if the query fails."""
    try:
        info = pltpu.get_tpu_info()
        cap = getattr(info, "vmem_capacity_bytes", None)
        if cap:
            return int(cap)
    except Exception:
        pass
    return 64 << 20


def _pick_vocab_tile(v, d, weight_tile_budget):
    """Largest lane-aligned vocab tile dividing V whose double-buffered bf16
    (D, tn) weight tile stays under `weight_tile_budget` bytes."""
    if v % 128 != 0:
        return v
    max_tn = max(128, weight_tile_budget // (4 * d))   # 2 buffers * 2 bytes
    for cand in (1024, 512, 256, 128):
        if cand <= max_tn and v % cand == 0:
            return cand
    return 128


def _pick_norm_tile(v, tm, budget):
    """Vocab tile for the normalize sweep (in + out blocks, f32, 2 buffers)."""
    if v % 128 != 0:
        return v
    max_tn = max(128, budget // (16 * tm))
    for cand in (4096, 2048, 1024, 512, 256, 128):
        if cand <= max_tn and v % cand == 0:
            return cand
    return 128


# ---------------------------------------------------------------------------
# Pass 1: raw logits (blocked over rows x vocab) + online log-sum-exp stats.
# ---------------------------------------------------------------------------
def _logits_lse_kernel(x_ref, w_ref, b_ref, logits_ref, lse_ref, m_sc, l_sc):
    # x_ref: (TM, D) bf16    w_ref: (D, TN) bf16    b_ref: (1, TN) f32
    # logits_ref: (TM, TN) f32  -- blocked in both i and j (streams to HBM)
    # lse_ref:    (TM, 1)  f32  -- resident across j, written on last step
    # m_sc, l_sc: (TM, 1)  f32  -- running max / running sum-of-exp
    j = pl.program_id(1)

    @pl.when(j == 0)
    def _():
        m_sc[...] = jnp.full_like(m_sc, -jnp.inf)
        l_sc[...] = jnp.zeros_like(l_sc)

    logits = jnp.dot(x_ref[...], w_ref[...], preferred_element_type=jnp.float32)
    logits = logits + b_ref[...]                     # broadcast (1, TN) over rows
    logits_ref[...] = logits

    # Online (tm, 1) stats update — hides under MXU / weight DMA.
    m_prev = m_sc[...]
    m_new = jnp.maximum(m_prev, jnp.max(logits, axis=-1, keepdims=True))
    l_sc[...] = (l_sc[...] * jnp.exp(m_prev - m_new)
                 + jnp.sum(jnp.exp(logits - m_new), axis=-1, keepdims=True))
    m_sc[...] = m_new

    @pl.when(j == pl.num_programs(1) - 1)
    def _():
        lse_ref[...] = m_sc[...] + jnp.log(l_sc[...])


# ---------------------------------------------------------------------------
# Pass 2: normalize in place:  log_softmax = logits - lse.
# ---------------------------------------------------------------------------
def _normalize_kernel(logits_ref, lse_ref, o_ref):
    o_ref[...] = (logits_ref[...] - lse_ref[...]).astype(o_ref.dtype)


@functools.partial(jax.jit, static_argnames=("tm",))
def projection_log_softmax(x, w_bf16, b, *, tm=256):
    """x: (B, S, D) f32, w_bf16: (D, V) (== W.T, ideally pre-cast to bf16 once),
    b: (V,) f32  ->  (B, S, V) f32 log-probabilities."""
    B, S, D = x.shape
    V = w_bf16.shape[1]
    M = B * S

    # Row tile: multiple of 16 (bf16 sublane packing), clipped for small M.
    tm_eff = min(tm, _round_up(M, 16))
    m_pad = _round_up(M, tm_eff)

    x2 = x.reshape(M, D).astype(jnp.bfloat16)
    if m_pad != M:
        x2 = jnp.pad(x2, ((0, m_pad - M), (0, 0)))
    if w_bf16.dtype != jnp.bfloat16:
        # Fallback only — callers should cast/cache the bf16 weight once.
        w_bf16 = w_bf16.astype(jnp.bfloat16)
    b2 = b.reshape(1, V).astype(jnp.float32)

    vmem_cap = _vmem_cap_bytes()
    tn = _pick_vocab_tile(V, D, weight_tile_budget=vmem_cap // 8)

    # VMEM budget, pass 1 (double-buffered tiles + tiny scratch + headroom).
    vmem_bytes_1 = (
        2 * tm_eff * D * 2        # x row tile, bf16, 2 buffers
        + 2 * D * tn * 2          # weight vocab tile, bf16, 2 buffers
        + 2 * tn * 4              # bias tile, f32, 2 buffers
        + 2 * tm_eff * tn * 4     # logits output block, f32, 2 buffers
        + 2 * tm_eff * 4          # lse output block
        + 2 * tm_eff * 4          # m/l scratch
        + (2 << 20)               # headroom
    )
    vmem_limit_1 = int(min(max(vmem_bytes_1, 16 << 20), int(0.85 * vmem_cap)))

    logits, lse = pl.pallas_call(
        _logits_lse_kernel,
        out_shape=(jax.ShapeDtypeStruct((m_pad, V), jnp.float32),
                   jax.ShapeDtypeStruct((m_pad, 1), jnp.float32)),
        grid_spec=pltpu.PrefetchScalarGridSpec(
            num_scalar_prefetch=0,
            grid=(m_pad // tm_eff, V // tn),
            in_specs=[
                pl.BlockSpec((tm_eff, D), lambda i, j: (i, 0)),   # activations
                pl.BlockSpec((D, tn), lambda i, j: (0, j)),       # weight V-tile
                pl.BlockSpec((1, tn), lambda i, j: (0, j)),       # bias V-tile
            ],
            out_specs=(
                pl.BlockSpec((tm_eff, tn), lambda i, j: (i, j)),  # raw logits
                pl.BlockSpec((tm_eff, 1), lambda i, j: (i, 0)),   # lse per row
            ),
            scratch_shapes=[pltpu.VMEM((tm_eff, 1), jnp.float32),  # running max
                            pltpu.VMEM((tm_eff, 1), jnp.float32)],  # running sum
        ),
        compiler_params=pltpu.CompilerParams(
            dimension_semantics=("parallel", "arbitrary"),
            vmem_limit_bytes=vmem_limit_1,
        ),
    )(x2, w_bf16, b2)

    # Pass 2: cheap blocked `logits - lse`, aliased in place over the logits.
    tn2 = _pick_norm_tile(V, tm_eff, budget=vmem_cap // 3)
    vmem_bytes_2 = 4 * tm_eff * tn2 * 4 + 2 * tm_eff * 4 + (2 << 20)
    vmem_limit_2 = int(min(max(vmem_bytes_2, 16 << 20), int(0.85 * vmem_cap)))

    out = pl.pallas_call(
        _normalize_kernel,
        out_shape=jax.ShapeDtypeStruct((m_pad, V), jnp.float32),
        grid_spec=pltpu.PrefetchScalarGridSpec(
            num_scalar_prefetch=0,
            grid=(m_pad // tm_eff, V // tn2),
            in_specs=[
                pl.BlockSpec((tm_eff, tn2), lambda i, j: (i, j)),  # logits
                pl.BlockSpec((tm_eff, 1), lambda i, j: (i, 0)),    # lse
            ],
            out_specs=pl.BlockSpec((tm_eff, tn2), lambda i, j: (i, j)),
        ),
        compiler_params=pltpu.CompilerParams(
            dimension_semantics=("parallel", "parallel"),
            vmem_limit_bytes=vmem_limit_2,
        ),
        input_output_aliases={0: 0},     # normalize in place, no extra HBM buf
    )(logits, lse)

    if m_pad != M:
        out = out[:M]
    return out.reshape(B, S, V)


def init_params(key, d_model, vocab_size):
    """Deterministic init mimicking nn.Linear default (uniform +/- 1/sqrt(d_model))."""
    kw, kb = jax.random.split(key)
    bound = 1.0 / math.sqrt(d_model)
    # stored as (d_model, vocab) == W.T relative to PyTorch's (vocab, d_model)
    w = jax.random.uniform(kw, (d_model, vocab_size), jnp.float32, -bound, bound)
    b = jax.random.uniform(kb, (vocab_size,), jnp.float32, -bound, bound)
    return w, b


if __name__ == "__main__":
    d_model = 32
    vocab_size = 128
    batch, seq = 2, 8

    key = jax.random.PRNGKey(0)
    kx, kp = jax.random.split(key)
    x = jax.random.normal(kx, (batch, seq, d_model), dtype=jnp.float32)
    w, b = init_params(kp, d_model, vocab_size)

    # Cast the weight once and reuse it across calls (avoids a per-call D*V cast).
    w_bf16 = jnp.asarray(w, dtype=jnp.bfloat16)

    y = projection_log_softmax(x, w_bf16, b)
    y = jax.block_until_ready(y)

    # Reference with the same bf16 operand rounding as the MXU path
    # (matmul accumulation stays in f32 in both).
    xb = x.astype(jnp.bfloat16).astype(jnp.float32)
    wb = w_bf16.astype(jnp.float32)
    ref = jax.nn.log_softmax(xb @ wb + b, axis=-1)

    assert y.shape == (batch, seq, vocab_size)
    err = float(jnp.max(jnp.abs(y - ref)))
    assert jnp.allclose(y, ref, atol=2e-3, rtol=2e-3), err

    print("KERNEL_OK")
</pallas_src>

<mosaic_0001>
module attributes {stable_mosaic.version = 11 : i64} {
  func.func @_normalize_kernel(%arg0: i32, %arg1: i32, %arg2: memref<16x128xf32, #tpu.memory_space<vmem>>, %arg3: memref<16x1xf32, #tpu.memory_space<vmem>>, %arg4: memref<16x128xf32, #tpu.memory_space<vmem>>) attributes {dimension_semantics = [#tpu.dimension_semantics<parallel>, #tpu.dimension_semantics<parallel>], iteration_bounds = array<i64: 1, 1>, scalar_prefetch = 0 : i64, scratch_operands = 0 : i64, tpu.core_type = #tpu.core_type<tc>, window_params = [{transform_indices = @transform_0, window_bounds = array<i64: 16, 128>}, {transform_indices = @transform_1, window_bounds = array<i64: 16, 1>}, {transform_indices = @transform_2, window_bounds = array<i64: 16, 128>}]} {
    %c0 = arith.constant 0 : index
    %c0_0 = arith.constant 0 : index
    %0 = vector.load %arg2[%c0, %c0_0] : memref<16x128xf32, #tpu.memory_space<vmem>>, vector<16x128xf32>
    %c0_1 = arith.constant 0 : index
    %c0_2 = arith.constant 0 : index
    %1 = vector.load %arg3[%c0_1, %c0_2] : memref<16x1xf32, #tpu.memory_space<vmem>>, vector<16x1xf32>
    %2 = vector.broadcast %1 : vector<16x1xf32> to vector<16x128xf32>
    %3 = arith.subf %0, %2 : vector<16x128xf32>
    %c0_3 = arith.constant 0 : index
    %c0_4 = arith.constant 0 : index
    %4 = vector.load %arg4[%c0_3, %c0_4] : memref<16x128xf32, #tpu.memory_space<vmem>>, vector<16x128xf32>
    tpu.vector_store %arg4[%c0_3, %c0_4], %3 {strides = array<i32>} : memref<16x128xf32, #tpu.memory_space<vmem>>, vector<16x128xf32>,
    return
  }
  func.func @transform_0(%arg0: i32, %arg1: i32) -> (i32, i32) {
    %c0_i32 = arith.constant 0 : i32
    return %arg0, %arg1 : i32, i32
  }
  func.func @transform_1(%arg0: i32, %arg1: i32) -> (i32, i32) {
    %c0_i32 = arith.constant 0 : i32
    %c0_i32_0 = arith.constant 0 : i32
    return %arg0, %c0_i32 : i32, i32
  }
  func.func @transform_2(%arg0: i32, %arg1: i32) -> (i32, i32) {
    %c0_i32 = arith.constant 0 : i32
    return %arg0, %arg1 : i32, i32
  }
}

module attributes {stable_mosaic.version = 11 : i64} {
  func.func @_logits_lse_kernel(%arg0: i32, %arg1: i32, %arg2: memref<16x32xbf16, #tpu.memory_space<vmem>>, %arg3: memref<32x128xbf16, #tpu.memory_space<vmem>>, %arg4: memref<1x128xf32, #tpu.memory_space<vmem>>, %arg5: memref<16x128xf32, #tpu.memory_space<vmem>>, %arg6: memref<16x1xf32, #tpu.memory_space<vmem>>, %arg7: memref<16x1xf32, #tpu.memory_space<vmem>>, %arg8: memref<16x1xf32, #tpu.memory_space<vmem>>) attributes {dimension_semantics = [#tpu.dimension_semantics<parallel>, #tpu.dimension_semantics<arbitrary>], iteration_bounds = array<i64: 1, 1>, scalar_prefetch = 0 : i64, scratch_operands = 2 : i64, tpu.core_type = #tpu.core_type<tc>, window_params = [{transform_indices = @transform_0, window_bounds = array<i64: 16, 32>}, {transform_indices = @transform_1, window_bounds = array<i64: 32, 128>}, {transform_indices = @transform_2, window_bounds = array<i64: 1, 128>}, {transform_indices = @transform_3, window_bounds = array<i64: 16, 128>}, {transform_indices = @transform_4, window_bounds = array<i64: 16, 1>}]} {
    %c0_i32 = arith.constant 0 : i32
    %0 = arith.cmpi eq, %arg1, %c0_i32 : i32
    %1 = arith.extui %0 : i1 to i32
    %c0_i32_0 = arith.constant 0 : i32
    %2 = arith.cmpi ne, %1, %c0_i32_0 : i32
    scf.if %2 {
      %cst_20 = arith.constant 0xFF800000 : f32
      %29 = vector.broadcast %cst_20 : f32 to vector<16x1xf32>
      %c0_21 = arith.constant 0 : index
      %c0_22 = arith.constant 0 : index
      %30 = vector.load %arg7[%c0_21, %c0_22] : memref<16x1xf32, #tpu.memory_space<vmem>>, vector<16x1xf32>
      tpu.vector_store %arg7[%c0_21, %c0_22], %29 {strides = array<i32>} : memref<16x1xf32, #tpu.memory_space<vmem>>, vector<16x1xf32>,
      %cst_23 = arith.constant 0.000000e+00 : f32
      %31 = vector.broadcast %cst_23 : f32 to vector<16x1xf32>
      %c0_24 = arith.constant 0 : index
      %c0_25 = arith.constant 0 : index
      %32 = vector.load %arg8[%c0_24, %c0_25] : memref<16x1xf32, #tpu.memory_space<vmem>>, vector<16x1xf32>
      tpu.vector_store %arg8[%c0_24, %c0_25], %31 {strides = array<i32>} : memref<16x1xf32, #tpu.memory_space<vmem>>, vector<16x1xf32>,
    } else {
    }
    %c0 = arith.constant 0 : index
    %c0_1 = arith.constant 0 : index
    %3 = vector.load %arg2[%c0, %c0_1] : memref<16x32xbf16, #tpu.memory_space<vmem>>, vector<16x32xbf16>
    %c0_2 = arith.constant 0 : index
    %c0_3 = arith.constant 0 : index
    %4 = vector.load %arg3[%c0_2, %c0_3] : memref<32x128xbf16, #tpu.memory_space<vmem>>, vector<32x128xbf16>
    %cst = arith.constant dense<0.000000e+00> : vector<16x128xf32>
    %5 = tpu.matmul %3, %4, %cst {dimension_numbers = #tpu.dot_dimension_numbers<[1], [0], [0], [1], [0, 0, 1, 1], [], []>} : vector<16x32xbf16>, vector<32x128xbf16>, vector<16x128xf32> -> vector<16x128xf32>
    %c0_4 = arith.constant 0 : index
    %c0_5 = arith.constant 0 : index
    %6 = vector.load %arg4[%c0_4, %c0_5] : memref<1x128xf32, #tpu.memory_space<vmem>>, vector<1x128xf32>
    %7 = vector.broadcast %6 : vector<1x128xf32> to vector<16x128xf32>
    %8 = arith.addf %5, %7 : vector<16x128xf32>
    %c0_6 = arith.constant 0 : index
    %c0_7 = arith.constant 0 : index
    %9 = vector.load %arg5[%c0_6, %c0_7] : memref<16x128xf32, #tpu.memory_space<vmem>>, vector<16x128xf32>
    tpu.vector_store %arg5[%c0_6, %c0_7], %8 {strides = array<i32>} : memref<16x128xf32, #tpu.memory_space<vmem>>, vector<16x128xf32>,
    %c0_8 = arith.constant 0 : index
    %c0_9 = arith.constant 0 : index
    %10 = vector.load %arg7[%c0_8, %c0_9] : memref<16x1xf32, #tpu.memory_space<vmem>>, vector<16x1xf32>
    %cst_10 = arith.constant dense<0xFF800000> : vector<16xf32>
    %11 = vector.multi_reduction <maximumf>, %8, %cst_10 [1] : vector<16x128xf32> to vector<16xf32>
    %12 = vector.shape_cast %11 : vector<16xf32> to vector<16x1xf32>
    %13 = arith.maximumf %10, %12 : vector<16x1xf32>
    %c0_11 = arith.constant 0 : index
    %c0_12 = arith.constant 0 : index
    %14 = vector.load %arg8[%c0_11, %c0_12] : memref<16x1xf32, #tpu.memory_space<vmem>>, vector<16x1xf32>
    %15 = arith.subf %10, %13 : vector<16x1xf32>
    %16 = math.exp %15 : vector<16x1xf32>
    %17 = arith.mulf %14, %16 : vector<16x1xf32>
    %18 = vector.broadcast %13 : vector<16x1xf32> to vector<16x128xf32>
    %19 = arith.subf %8, %18 : vector<16x128xf32>
    %20 = math.exp %19 : vector<16x128xf32>
    %cst_13 = arith.constant dense<0.000000e+00> : vector<16xf32>
    %21 = vector.multi_reduction <add>, %20, %cst_13 [1] : vector<16x128xf32> to vector<16xf32>
    %22 = vector.shape_cast %21 : vector<16xf32> to vector<16x1xf32>
    %23 = arith.addf %17, %22 : vector<16x1xf32>
    %c0_14 = arith.constant 0 : index
    %c0_15 = arith.constant 0 : index
    %24 = vector.load %arg8[%c0_14, %c0_15] : memref<16x1xf32, #tpu.memory_space<vmem>>, vector<16x1xf32>
    tpu.vector_store %arg8[%c0_14, %c0_15], %23 {strides = array<i32>} : memref<16x1xf32, #tpu.memory_space<vmem>>, vector<16x1xf32>,
    %c0_16 = arith.constant 0 : index
    %c0_17 = arith.constant 0 : index
    %25 = vector.load %arg7[%c0_16, %c0_17] : memref<16x1xf32, #tpu.memory_space<vmem>>, vector<16x1xf32>
    tpu.vector_store %arg7[%c0_16, %c0_17], %13 {strides = array<i32>} : memref<16x1xf32, #tpu.memory_space<vmem>>, vector<16x1xf32>,
    %c0_i32_18 = arith.constant 0 : i32
    %26 = arith.cmpi eq, %arg1, %c0_i32_18 : i32
    %27 = arith.extui %26 : i1 to i32
    %c0_i32_19 = arith.constant 0 : i32
    %28 = arith.cmpi ne, %27, %c0_i32_19 : i32
    scf.if %28 {
      %c0_20 = arith.constant 0 : index
      %c0_21 = arith.constant 0 : index
      %29 = vector.load %arg7[%c0_20, %c0_21] : memref<16x1xf32, #tpu.memory_space<vmem>>, vector<16x1xf32>
      %c0_22 = arith.constant 0 : index
      %c0_23 = arith.constant 0 : index
      %30 = vector.load %arg8[%c0_22, %c0_23] : memref<16x1xf32, #tpu.memory_space<vmem>>, vector<16x1xf32>
      %31 = math.log %30 : vector<16x1xf32>
      %32 = arith.addf %29, %31 : vector<16x1xf32>
      %c0_24 = arith.constant 0 : index
      %c0_25 = arith.constant 0 : index
      %33 = vector.load %arg6[%c0_24, %c0_25] : memref<16x1xf32, #tpu.memory_space<vmem>>, vector<16x1xf32>
      tpu.vector_store %arg6[%c0_24, %c0_25], %32 {strides = array<i32>} : memref<16x1xf32, #tpu.memory_space<vmem>>, vector<16x1xf32>,
    } else {
    }
    return
  }
  func.func @transform_0(%arg0: i32, %arg1: i32) -> (i32, i32) {
    %c0_i32 = arith.constant 0 : i32
    %c0_i32_0 = arith.constant 0 : i32
    return %arg0, %c0_i32 : i32, i32
  }
  func.func @transform_1(%arg0: i32, %arg1: i32) -> (i32, i32) {
    %c0_i32 = arith.constant 0 : i32
    %c0_i32_0 = arith.constant 0 : i32
    return %c0_i32, %arg1 : i32, i32
  }
  func.func @transform_2(%arg0: i32, %arg1: i32) -> (i32, i32) {
    %c0_i32 = arith.constant 0 : i32
    %c0_i32_0 = arith.constant 0 : i32
    return %c0_i32, %arg1 : i32, i32
  }
  func.func @transform_3(%arg0: i32, %arg1: i32) -> (i32, i32) {
    %c0_i32 = arith.constant 0 : i32
    return %arg0, %arg1 : i32, i32
  }
  func.func @transform_4(%arg0: i32, %arg1: i32) -> (i32, i32) {
    %c0_i32 = arith.constant 0 : i32
    %c0_i32_0 = arith.constant 0 : i32
    return %arg0, %c0_i32 : i32, i32
  }
}

</mosaic_0001>

<llo_original>
// kernel: projection_log_softmax.3
$region0: #{projection_log_softmax.3}
  #allocation0 [shape = 'u32[]', space=smem, size = 0x4, offset = 0x4, fixed_abs, tag = 'smem constant byte address 0x4 - core index']
  #allocation1 [shape = 'u32[144,128]{1,0:T(1,128)}', space=vmem, size = 0x12000, scoped, tag = 'internal scratch']
  %s0 = inlined_call_operand.vmem [shape: f32[16,128], index: 0, kind: input, shape index: {}, may-alias: {0,2}]
  %s1 = inlined_call_operand.vmem [shape: f32[16,1], index: 1, kind: input, shape index: {}]
  %s2 = inlined_call_operand.vmem [shape: f32[16,128], index: 2, kind: output, shape index: {}, may-alias: {0,2}]
  %s3 = sld [smem:[#allocation0]]
  $region18: #{projection_log_softmax.3} parent=0
    _
  %s5 = ssub.s32 1, %s3
  %s6 = scalar_select 0, %s5, %s3
  // Predicated region
  $region2: #{projection_log_softmax.3} parent=0 // pred_check
    _
  $region3: #{projection_log_softmax.3} parent=0 // pred_check_branch
    %8 = sbr.rel (0) target = $region5
  $region4: #{projection_log_softmax.3} parent=0 // pred_region
    _
  $region5: #{projection_log_softmax.3} parent=0 // pred_fallthru
    _
  // Predicated region
  $region6: #{projection_log_softmax.3} parent=0 // pred_check
    _
  $region7: #{projection_log_softmax.3} parent=0 // pred_check_branch
    %10 = sbr.rel (0) target = $region9
  $region8: #{projection_log_softmax.3} parent=0 // pred_region
    _
  $region9: #{projection_log_softmax.3} parent=0 // pred_fallthru
    _
  %v11 = vld [vmem:[%s0] sm:$0xff]
  %v12 = vld [vmem:[%s0 + $0x8] sm:$0xff]
  %v13 = vld [vmem:[%s1] sm:$0xff]
  %v14 = vld [vmem:[%s1 + $0x8] sm:$0xff]
  %16 = vset.pattern.permute.xlu0 0
  %17 = vperm.xlu0 %16, %v13
  %v18 = vpop.permute.xlu0 %17
  %21 = vset.pattern.permute.xlu0 0
  %22 = vperm.xlu0 %21, %v14
  %v23 = vpop.permute.xlu0 %22
  %v25 = vsub.f32 %v11, %v18
  %v26 = vsub.f32 %v12, %v23
  %27 = vst [vmem:[%s2] sm:$0xff] %v25
  %28 = vst [vmem:[%s2 + $0x8] sm:$0xff] %v26
  // Predicated region
  $region10: #{projection_log_softmax.3} parent=0 // pred_check
    _
  $region11: #{projection_log_softmax.3} parent=0 // pred_check_branch
    %30 = sbr.rel (0) target = $region13
  $region12: #{projection_log_softmax.3} parent=0 // pred_region
    _
  $region13: #{projection_log_softmax.3} parent=0 // pred_fallthru
    _
  // Predicated region
  $region14: #{projection_log_softmax.3} parent=0 // pred_check
    _
  $region15: #{projection_log_softmax.3} parent=0 // pred_check_branch
    %32 = sbr.rel (0) target = $region17
  $region16: #{projection_log_softmax.3} parent=0 // pred_region
    _
  $region17: #{projection_log_softmax.3} parent=0 // pred_fallthru
    _

// kernel: projection_log_softmax.2
$region0: #{projection_log_softmax.2}
  #allocation0 [shape = 'u32[]', space=smem, size = 0x4, offset = 0x4, fixed_abs, tag = 'smem constant byte address 0x4 - core index']
  #allocation1 [shape = 'u32[144,128]{1,0:T(1,128)}', space=vmem, size = 0x12000, scoped, tag = 'internal scratch']
  #allocation2 [shape = 'f32[16,1]{1,0:T(8,128)}', space=vmem, size = 0x2000, scoped, tag = 'scratch operand']
  #allocation3 [shape = 'f32[16,1]{1,0:T(8,128)}', space=vmem, size = 0x2000, scoped, tag = 'scratch operand']
  %s0 = inlined_call_operand.vmem [shape: bf16[16,32], index: 0, kind: input, shape index: {}]
  %s1 = inlined_call_operand.vmem [shape: bf16[32,128], index: 1, kind: input, shape index: {}]
  %s2 = inlined_call_operand.vmem [shape: f32[1,128], index: 2, kind: input, shape index: {}]
  %s3 = inlined_call_operand.vmem [shape: f32[16,128], index: 3, kind: output, shape index: {0}]
  %s4 = inlined_call_operand.vmem [shape: f32[16,1], index: 4, kind: output, shape index: {1}]
  %5 = xla_tuple %s3, %s4
  %s6 = sld [smem:[#allocation0]]
  $region38: #{projection_log_softmax.2} parent=0
    _
  %s8 = ssub.s32 1, %s6
  %s9 = scalar_select 0, %s8, %s6
  // Predicated region
  $region2: #{projection_log_softmax.2} parent=0 // pred_check
    _
  $region3: #{projection_log_softmax.2} parent=0 // pred_check_branch
    %11 = sbr.rel (0) target = $region5
  $region4: #{projection_log_softmax.2} parent=0 // pred_region
    _
  $region5: #{projection_log_softmax.2} parent=0 // pred_fallthru
    _
  // Predicated region
  $region6: #{projection_log_softmax.2} parent=0 // pred_check
    _
  $region7: #{projection_log_softmax.2} parent=0 // pred_check_branch
    %13 = sbr.rel (0) target = $region9
  $region8: #{projection_log_softmax.2} parent=0 // pred_region
    _
  $region9: #{projection_log_softmax.2} parent=0 // pred_fallthru
    _
  // Predicated region
  $region10: #{projection_log_softmax.2} parent=0 // pred_check
    _
  $region11: #{projection_log_softmax.2} parent=0 // pred_check_branch
    %15 = sbr.rel (0) target = $region13
  $region12: #{projection_log_softmax.2} parent=0 // pred_region
    _
  $region13: #{projection_log_softmax.2} parent=0 // pred_fallthru
    _
  %p17 = scmp.eq.s32.totalorder 0, 0
  // Predicated region
  $region14: #{projection_log_softmax.2} parent=0 // pred_check
    %p18 = pneg %p17
  $region15: #{projection_log_softmax.2} parent=0 // pred_check_branch
    %20 = sbr.rel (%p18) target = $region17
  $region16: #{projection_log_softmax.2} parent=0 // pred_region
    %vm21 = vcmask 7168
    %22 = vst.msk [vmem:[#allocation2] sm:$0xff] %vm21, -inf
    %23 = vst.msk [vmem:[#allocation2 + $0x8] sm:$0xff] %vm21, -inf
    %24 = vst.msk [vmem:[#allocation3] sm:$0xff] %vm21, 0.0
    %25 = vst.msk [vmem:[#allocation3 + $0x8] sm:$0xff] %vm21, 0.0
  $region17: #{projection_log_softmax.2} parent=0 // pred_fallthru
    _
  %v26 = vld [vmem:[%s0] sm:$0xf]
  %v27 = vld [vmem:[%s0 + $0x4] sm:$0xf]
  %v28 = vld [vmem:[%s1] sm:$0xf]
  %v29 = vld [vmem:[%s1 + $0x4] sm:$0xf]
  %v30 = vld [vmem:[%s1 + $0x8] sm:$0xf]
  %v31 = vld [vmem:[%s1 + $0xc] sm:$0xf]
  %v32 = vld [vmem:[%s2] sm:$0x1]
  %v34 = vlaneseq
  %v35 = vshrl.u32 %v34, 7
  %v36 = vsub.s32 0, %v35
  %v37 = vrot.slane %v32, %v36
  %v41 = vunpack.c.l.b16 %v26
  %v42 = vunpack.c.l.b16 %v27
  %v43 = vpack.c.b16 %v42, %v41
  %v48 = vunpack.c.l.b16 %v28
  %v49 = vunpack.c.l.b16 %v29
  %v50 = vunpack.c.l.b16 %v30
  %v51 = vunpack.c.l.b16 %v31
  %v52 = vpack.c.b16 %v49, %v48
  %v53 = vpack.c.b16 %v51, %v50
  %vm56 = vcmask 261120
  %v58 = vsel %vm56, %v43, 0
  %60 = vmatprep.subr.bf16.mxu0 0
  %61 = vmatpush1.bf16.msra.mxu0 0
  %62 = vmatprep.subr.bf16.mxu0 0
  %63 = vmatpush1.bf16.msra.mxu0 0
  %64 = vmatprep.subr.bf16.mxu0 0
  %65 = vmatpush1.bf16.msra.mxu0 0
  %66 = vmatprep.subr.bf16.mxu0 0
  %67 = vmatpush1.bf16.msra.mxu0 0
  %68 = vmatprep.subr.bf16.mxu0 0
  %69 = vmatpush1.bf16.msra.mxu0 0
  %70 = vmatprep.subr.bf16.mxu0 0
  %71 = vmatpush1.bf16.msra.mxu0 0
  %72 = vmatprep.subr.bf16.mxu0 0
  %73 = vmatpush1.bf16.msra.mxu0 %v53
  %74 = vmatprep.subr.bf16.mxu0 0
  %75 = vmatpush1.bf16.msra.mxu0 %v52
  %76 = vmatprep.subr.bf16.mxu0 0
  %77 = vmatpush2.bf16.msra.mxu0 0
  %78 = vmatprep.subr.bf16.mxu0 0
  %79 = vmatpush2.bf16.msra.mxu0 0
  %80 = vmatprep.subr.bf16.mxu0 0
  %81 = vmatpush2.bf16.msra.mxu0 0
  %82 = vmatprep.subr.bf16.mxu0 0
  %83 = vmatpush2.bf16.msra.mxu0 0
  %84 = vmatprep.subr.bf16.mxu0 0
  %85 = vmatpush2.bf16.msra.mxu0 0
  %86 = vmatprep.subr.bf16.mxu0 0
  %87 = vmatpush2.bf16.msra.mxu0 0
  %88 = vmatprep.subr.bf16.mxu0 0
  %89 = vmatpush2.bf16.msra.mxu0 0
  %90 = vmatprep.subr.bf16.mxu0 0
  %91 = vmatpush2.bf16.msra.mxu0 0
  %92 = vmatprep.mubr.bf16.mxu0 0
  %93 = vmatmul.mubr.bf16.gmra.mxu0 %v58
  %v94 = vpop.f32.mrf.mxu0
  %v95 = vadd.f32 %v37, %v94
  %v96 = vpop.f32.mrf.mxu0
  %v97 = vpop.f32.mrf.mxu0
  %v98 = vadd.f32 %v37, %v97
  %v99 = vpop.f32.mrf.mxu0
  %100 = vdwg.mxu0
  %101 = vst [vmem:[%s3] sm:$0xff] %v95
  %102 = vst [vmem:[%s3 + $0x8] sm:$0xff] %v98
  %v103 = vld [vmem:[#allocation2] sm:$0xff]
  %v104 = vld [vmem:[#allocation2 + $0x8] sm:$0xff]
  %105 = vmax.xlane.f32.xlu0 %v95
  %v106 = vpop.xlane.xlu0 %105
  %107 = vmax.xlane.f32.xlu0 %v98
  %v108 = vpop.xlane.xlu0 %107
  %v109 = vmax.f32 %v103, %v106
  %v110 = vmax.f32 %v104, %v108
  %v111 = vld [vmem:[#allocation3] sm:$0xff]
  %v112 = vld [vmem:[#allocation3 + $0x8] sm:$0xff]
  %v113 = vsub.f32 %v103, %v109
  %v114 = vsub.f32 %v104, %v110
  %v115 = vmul.f32 %v113, 1.442695
  %v116 = vpow.pop %v115
  %v117 = vmul.f32 %v114, 1.442695
  %v118 = vpow.pop %v117
  %v119 = vmul.f32 %v111, %v116
  %v120 = vmul.f32 %v112, %v118
  %122 = vset.pattern.permute.xlu0 0
  %123 = vperm.xlu0 %122, %v109
  %v124 = vpop.permute.xlu0 %123
  %127 = vset.pattern.permute.xlu0 0
  %128 = vperm.xlu0 %127, %v110
  %v129 = vpop.permute.xlu0 %128
  %v131 = vsub.f32 %v95, %v124
  %v132 = vsub.f32 %v98, %v129
  %v133 = vmul.f32 %v131, 1.442695
  %v134 = vpow.pop %v133
  %v135 = vmul.f32 %v132, 1.442695
  %v136 = vpow.pop %v135
  %137 = vadd.xlane.f32.xlu0 %v134
  %v138 = vpop.xlane.xlu0 %137
  %139 = vadd.xlane.f32.xlu0 %v136
  %v140 = vpop.xlane.xlu0 %139
  %v141 = vadd.f32 %v119, %v138
  %v142 = vadd.f32 %v120, %v140
  %vm143 = vcmask 7168
  %144 = vst.msk [vmem:[#allocation3] sm:$0xff] %vm143, %v141
  %145 = vst.msk [vmem:[#allocation3 + $0x8] sm:$0xff] %vm143, %v142
  %146 = vst.msk [vmem:[#allocation2] sm:$0xff] %vm143, %v109
  %147 = vst.msk [vmem:[#allocation2 + $0x8] sm:$0xff] %vm143, %v110
  // Predicated region
  $region18: #{projection_log_softmax.2} parent=0 // pred_check
    %p148 = pneg %p17
  $region19: #{projection_log_softmax.2} parent=0 // pred_check_branch
    %150 = sbr.rel (%p148) target = $region21
  $region20: #{projection_log_softmax.2} parent=0 // pred_region
    %v151 = vld [vmem:[#allocation2] sm:$0xff]
    %v152 = vld [vmem:[#allocation2 + $0x8] sm:$0xff]
    %v153 = vld [vmem:[#allocation3] sm:$0xff]
    %v154 = vld [vmem:[#allocation3 + $0x8] sm:$0xff]
    %v155 = vlog2.pop %v153
    %v156 = vmul.f32 %v155, 0.6931472
    %v157 = vlog2.pop %v154
    %v158 = vmul.f32 %v157, 0.6931472
    %v159 = vadd.f32 %v151, %v156
    %v160 = vadd.f32 %v152, %v158
    %161 = vst.msk [vmem:[%s4] sm:$0xff] %vm143, %v159
    %162 = vst.msk [vmem:[%s4 + $0x8] sm:$0xff] %vm143, %v160
  $region21: #{projection_log_softmax.2} parent=0 // pred_fallthru
    _
  // Predicated region
  $region22: #{projection_log_softmax.2} parent=0 // pred_check
    _
  $region23: #{projection_log_softmax.2} parent=0 // pred_check_branch
    %164 = sbr.rel (0) target = $region25
  $region24: #{projection_log_softmax.2} parent=0 // pred_region
    _
  $region25: #{projection_log_softmax.2} parent=0 // pred_fallthru
    _
  // Predicated region
  $region26: #{projection_log_softmax.2} parent=0 // pred_check
    _
  $region27: #{projection_log_softmax.2} parent=0 // pred_check_branch
    %166 = sbr.rel (0) target = $region29
  $region28: #{projection_log_softmax.2} parent=0 // pred_region
    _
  $region29: #{projection_log_softmax.2} parent=0 // pred_fallthru
    _
  // Predicated region
  $region30: #{projection_log_softmax.2} parent=0 // pred_check
    _
  $region31: #{projection_log_softmax.2} parent=0 // pred_check_branch
    %168 = sbr.rel (0) target = $region33
  $region32: #{projection_log_softmax.2} parent=0 // pred_region
    _
  $region33: #{projection_log_softmax.2} parent=0 // pred_fallthru
    _
  // Predicated region
  $region34: #{projection_log_softmax.2} parent=0 // pred_check
    _
  $region35: #{projection_log_softmax.2} parent=0 // pred_check_branch
    %170 = sbr.rel (0) target = $region37
  $region36: #{projection_log_softmax.2} parent=0 // pred_region
    _
  $region37: #{projection_log_softmax.2} parent=0 // pred_fallthru
    _

</llo_original>
